<compile_context>
chip_gen: v7x
topology: tpu7x:2x2x1
jax: 0.10.0
libtpu: 0.0.40
codegen_flags: <defaults>
</compile_context>

<pallas_src>
import functools

import jax
import jax.numpy as jnp
from jax import lax
from jax.experimental import pallas as pl
from jax.experimental.pallas import tpu as pltpu


def _round_up(x: int, m: int) -> int:
    return ((x + m - 1) // m) * m


def _physical_vmem_bytes() -> int:
    """Per-core physical VMEM; conservative fallback if the query is unavailable."""
    try:
        info = pltpu.get_tpu_info()
        cap = getattr(info, "vmem_capacity_bytes", None)
        if cap:
            return int(cap)
    except Exception:
        pass
    return 64 << 20  # v7x per-TensorCore size: safe lower bound everywhere


def _mlb_kernel(x1_ref, x2_ref, wi_ref, bi_ref, wq_ref, bq_ref, o_ref,
                *, matmul_dtype):
    # Activations arrive in their source dtype (f32) and are cast to the MXU
    # operand dtype on the fly (VPU cast hides under MXU/DMA).
    x1 = x1_ref[...].astype(matmul_dtype)
    x2 = x2_ref[...].astype(matmul_dtype)

    # proj_i / proj_q: MXU matmuls with f32 accumulation, f32 bias add.
    y1 = jnp.dot(x1, wi_ref[...], preferred_element_type=jnp.float32) + bi_ref[...]
    y2 = jnp.dot(x2, wq_ref[...], preferred_element_type=jnp.float32) + bq_ref[...]

    # Elementwise bilinear interaction (f32).
    z = y1 * y2

    # TODO(synk): training-mode dropout(p=0.1) would use pltpu.prng_random_bits;
    # eval-mode dropout is the identity, which is what we reproduce here.

    # F.normalize(z, dim=1):  z / max(||z||_2, 1e-12)
    #   == z * rsqrt(max(||z||^2, 1e-24))   (EUP rsqrt per row + VALU mul)
    sq_norm = jnp.sum(z * z, axis=-1, keepdims=True)
    inv = lax.rsqrt(jnp.maximum(sq_norm, 1e-24))
    o_ref[...] = (z * inv).astype(o_ref.dtype)


def prepare_mlb_params(w_i, b_i, w_q, b_q, matmul_dtype=jnp.bfloat16):
    """Pad weights to (F_pad, F_pad) and cast to the matmul operand dtype.

    Call this ONCE (model-load time), not per forward pass: it removes the
    per-call weight pad/cast HBM round trip.  Weights are stored [F_in, F_out]
    (pre-transposed) so the kernel computes y = x @ W + b.
    """
    F_in, F_out = w_i.shape
    Fi_pad = _round_up(F_in, 128)
    Fo_pad = _round_up(F_out, 128)

    def padw(w):
        return jnp.pad(w, ((0, Fi_pad - F_in), (0, Fo_pad - F_out))).astype(matmul_dtype)

    def padb(b):
        return jnp.pad(b, (0, Fo_pad - F_out)).reshape(1, Fo_pad).astype(jnp.float32)

    return padw(w_i), padb(b_i), padw(w_q), padb(b_q)


@functools.partial(jax.jit, static_argnames=("block_b",))
def mlb_forward(feat1, feat2, wi_p, bi_p, wq_p, bq_p, *, block_b=None):
    """feat1/feat2: [B, F] (f32).  wi_p/wq_p: [F_pad, F_pad] pre-padded/pre-cast
    (see prepare_mlb_params).  bi_p/bq_p: [1, F_pad] f32."""
    B, F = feat1.shape
    F_in_pad, F_pad = wi_p.shape
    out_dtype = feat1.dtype
    matmul_dtype = wi_p.dtype
    w_itemsize = jnp.dtype(matmul_dtype).itemsize
    x_itemsize = jnp.dtype(feat1.dtype).itemsize
    o_itemsize = jnp.dtype(out_dtype).itemsize

    # Generation-aware VMEM budget (85% of physical per-core VMEM).
    vmem_cap = _physical_vmem_bytes()
    vmem_limit = int(0.85 * vmem_cap)

    # Generation-aware default batch tile: larger tiles when VMEM is plentiful
    # (v5e/v6e: 128 MiB) and the weight pair is small; 256 otherwise (v7x).
    if block_b is None:
        block_b = 512 if (vmem_cap >= (100 << 20) and F_pad <= 2048) else 256

    # Balanced batch tiling: padding waste bounded by <8 rows per tile.
    n_tiles = max(1, pl.cdiv(B, block_b))
    TB = _round_up(pl.cdiv(B, n_tiles), 8)
    # Give v7x's two TensorCores work: avoid a single-step "parallel" grid when
    # the batch can be split.
    if pl.cdiv(B, TB) < 2 and TB > 8:
        TB = max(8, _round_up(pl.cdiv(B, 2), 8))
    B_pad = _round_up(B, TB)
    grid = (B_pad // TB,)

    # Activation padding (zero pads are exact: padded feature columns contribute
    # 0 to the matmuls and 0 to the row norms; padded rows are sliced off).
    def pad_act(x):
        if x.shape == (B_pad, F_in_pad):
            return x
        return jnp.pad(x, ((0, B_pad - B), (0, F_in_pad - F)))

    x1 = pad_act(feat1)
    x2 = pad_act(feat2)

    # Weights / biases: constant block index -> VMEM-resident across all grid
    # steps.  Single-buffer them when the default double-buffered pair would eat
    # a large slice of the VMEM budget (the 2nd buffer is never used anyway).
    weight_pair_db_bytes = 2 * 2 * F_in_pad * F_pad * w_itemsize
    single_buffer_weights = weight_pair_db_bytes > (vmem_limit // 3)

    def const_spec(shape, single):
        idx = lambda i: (0,) * len(shape)
        if single:
            try:
                return pl.BlockSpec(shape, idx, pipeline_mode=pl.Buffered(1))
            except TypeError:
                pass  # older Pallas without pipeline_mode: fall back to default
        return pl.BlockSpec(shape, idx)

    w_spec = const_spec((F_in_pad, F_pad), single_buffer_weights)
    b_spec = const_spec((1, F_pad), single_buffer_weights)

    # Activations / output: tiled over batch (lane-dense last dim = F_pad).
    act_spec = pl.BlockSpec((TB, F_in_pad), lambda i: (i, 0))
    out_spec = pl.BlockSpec((TB, F_pad), lambda i: (i, 0))

    cost = pl.CostEstimate(
        flops=2 * 2 * B_pad * F_in_pad * F_pad,        # two matmuls
        transcendentals=B_pad,                         # one rsqrt per row
        bytes_accessed=(2 * B_pad * F_in_pad * x_itemsize   # x1, x2
                        + 2 * F_in_pad * F_pad * w_itemsize  # wi, wq
                        + 2 * F_pad * 4                      # biases
                        + B_pad * F_pad * o_itemsize),       # output
    )

    out = pl.pallas_call(
        functools.partial(_mlb_kernel, matmul_dtype=matmul_dtype),
        out_shape=jax.ShapeDtypeStruct((B_pad, F_pad), out_dtype),
        grid=grid,
        in_specs=[act_spec, act_spec, w_spec, b_spec, w_spec, b_spec],
        out_specs=out_spec,
        compiler_params=pltpu.CompilerParams(
            dimension_semantics=("parallel",),
            vmem_limit_bytes=vmem_limit,
        ),
        cost_estimate=cost,
    )(x1, x2, wi_p, bi_p, wq_p, bq_p)

    if (B_pad, F_pad) != (B, F):
        out = out[:B, :F]
    return out


def reference_forward(feat1, feat2, w_i, b_i, w_q, b_q):
    y1 = feat1 @ w_i + b_i
    y2 = feat2 @ w_q + b_q
    z = y1 * y2
    norm = jnp.sqrt(jnp.sum(z * z, axis=1, keepdims=True))
    return z / jnp.maximum(norm, 1e-12)


if __name__ == "__main__":
    B = 8          # batch
    F = 128        # feat_size
    C = 4          # unused by forward (kept for parity with module signature)

    key = jax.random.PRNGKey(0)
    k1, k2, k3, k4, k5, k6 = jax.random.split(key, 6)

    feat1 = jax.random.normal(k1, (B, F), dtype=jnp.float32)
    feat2 = jax.random.normal(k2, (B, F), dtype=jnp.float32)

    # Deterministic parameter init mimicking nn.Linear: U(-1/sqrt(F), 1/sqrt(F)).
    bound = 1.0 / (F ** 0.5)
    w_i = jax.random.uniform(k3, (F, F), jnp.float32, -bound, bound)  # [in, out]
    b_i = jax.random.uniform(k4, (F,),   jnp.float32, -bound, bound)
    w_q = jax.random.uniform(k5, (F, F), jnp.float32, -bound, bound)  # [in, out]
    b_q = jax.random.uniform(k6, (F,),   jnp.float32, -bound, bound)

    ref = reference_forward(feat1, feat2, w_i, b_i, w_q, b_q)

    # Exact-precision path (f32 matmul operands): correctness/debug path,
    # tight tolerance.
    params_f32 = prepare_mlb_params(w_i, b_i, w_q, b_q, matmul_dtype=jnp.float32)
    out_f32 = mlb_forward(feat1, feat2, *params_f32)
    out_f32 = jax.block_until_ready(out_f32)
    assert out_f32.shape == (B, F)
    assert jnp.allclose(out_f32, ref, atol=1e-5, rtol=1e-5)

    # Default fast path (bf16 matmul operands, f32 accumulation/epilogue):
    # tolerance relaxed for bf16 operand rounding.
    params_bf16 = prepare_mlb_params(w_i, b_i, w_q, b_q, matmul_dtype=jnp.bfloat16)
    out_bf16 = mlb_forward(feat1, feat2, *params_bf16)
    out_bf16 = jax.block_until_ready(out_bf16)
    assert out_bf16.shape == (B, F)
    assert jnp.allclose(out_bf16, ref, atol=3e-2, rtol=3e-2)

    print("KERNEL_OK")
</pallas_src>

<mosaic_0001>
module attributes {stable_mosaic.version = 11 : i64} {
  func.func @_mlb_kernel(%arg0: i32, %arg1: memref<8x128xf32, #tpu.memory_space<vmem>>, %arg2: memref<8x128xf32, #tpu.memory_space<vmem>>, %arg3: memref<128x128xf32, #tpu.memory_space<vmem>>, %arg4: memref<1x128xf32, #tpu.memory_space<vmem>>, %arg5: memref<128x128xf32, #tpu.memory_space<vmem>>, %arg6: memref<1x128xf32, #tpu.memory_space<vmem>>, %arg7: memref<8x128xf32, #tpu.memory_space<vmem>>) attributes {dimension_semantics = [#tpu.dimension_semantics<parallel>], iteration_bounds = array<i64: 1>, scalar_prefetch = 0 : i64, scratch_operands = 0 : i64, tpu.core_type = #tpu.core_type<tc>, window_params = [{transform_indices = @transform_0, window_bounds = array<i64: 8, 128>}, {transform_indices = @transform_1, window_bounds = array<i64: 8, 128>}, {pipeline_mode = #tpu.pipeline_mode<synchronous>, transform_indices = @transform_2, window_bounds = array<i64: 128, 128>}, {pipeline_mode = #tpu.pipeline_mode<synchronous>, transform_indices = @transform_3, window_bounds = array<i64: 1, 128>}, {pipeline_mode = #tpu.pipeline_mode<synchronous>, transform_indices = @transform_4, window_bounds = array<i64: 128, 128>}, {pipeline_mode = #tpu.pipeline_mode<synchronous>, transform_indices = @transform_5, window_bounds = array<i64: 1, 128>}, {transform_indices = @transform_6, window_bounds = array<i64: 8, 128>}]} {
    %c0 = arith.constant 0 : index
    %c0_0 = arith.constant 0 : index
    %0 = vector.load %arg1[%c0, %c0_0] : memref<8x128xf32, #tpu.memory_space<vmem>>, vector<8x128xf32>
    %c0_1 = arith.constant 0 : index
    %c0_2 = arith.constant 0 : index
    %1 = vector.load %arg2[%c0_1, %c0_2] : memref<8x128xf32, #tpu.memory_space<vmem>>, vector<8x128xf32>
    %c0_3 = arith.constant 0 : index
    %c0_4 = arith.constant 0 : index
    %2 = vector.load %arg3[%c0_3, %c0_4] : memref<128x128xf32, #tpu.memory_space<vmem>>, vector<128x128xf32>
    %cst = arith.constant dense<0.000000e+00> : vector<8x128xf32>
    %3 = tpu.matmul %0, %2, %cst {dimension_numbers = #tpu.dot_dimension_numbers<[1], [0], [0], [1], [0, 0, 1, 1], [], []>} : vector<8x128xf32>, vector<128x128xf32>, vector<8x128xf32> -> vector<8x128xf32>
    %c0_5 = arith.constant 0 : index
    %c0_6 = arith.constant 0 : index
    %4 = vector.load %arg4[%c0_5, %c0_6] : memref<1x128xf32, #tpu.memory_space<vmem>>, vector<1x128xf32>
    %5 = vector.broadcast %4 : vector<1x128xf32> to vector<8x128xf32>
    %6 = arith.addf %3, %5 : vector<8x128xf32>
    %c0_7 = arith.constant 0 : index
    %c0_8 = arith.constant 0 : index
    %7 = vector.load %arg5[%c0_7, %c0_8] : memref<128x128xf32, #tpu.memory_space<vmem>>, vector<128x128xf32>
    %cst_9 = arith.constant dense<0.000000e+00> : vector<8x128xf32>
    %8 = tpu.matmul %1, %7, %cst_9 {dimension_numbers = #tpu.dot_dimension_numbers<[1], [0], [0], [1], [0, 0, 1, 1], [], []>} : vector<8x128xf32>, vector<128x128xf32>, vector<8x128xf32> -> vector<8x128xf32>
    %c0_10 = arith.constant 0 : index
    %c0_11 = arith.constant 0 : index
    %9 = vector.load %arg6[%c0_10, %c0_11] : memref<1x128xf32, #tpu.memory_space<vmem>>, vector<1x128xf32>
    %10 = vector.broadcast %9 : vector<1x128xf32> to vector<8x128xf32>
    %11 = arith.addf %8, %10 : vector<8x128xf32>
    %12 = arith.mulf %6, %11 : vector<8x128xf32>
    %13 = arith.mulf %12, %12 : vector<8x128xf32>
    %cst_12 = arith.constant dense<0.000000e+00> : vector<8xf32>
    %14 = vector.multi_reduction <add>, %13, %cst_12 [1] : vector<8x128xf32> to vector<8xf32>
    %15 = vector.shape_cast %14 : vector<8xf32> to vector<8x1xf32>
    %cst_13 = arith.constant 1.000000e-24 : f32
    %16 = vector.broadcast %cst_13 : f32 to vector<8x1xf32>
    %17 = arith.maximumf %15, %16 : vector<8x1xf32>
    %18 = math.rsqrt %17 : vector<8x1xf32>
    %19 = vector.broadcast %18 : vector<8x1xf32> to vector<8x128xf32>
    %20 = arith.mulf %12, %19 : vector<8x128xf32>
    %c0_14 = arith.constant 0 : index
    %c0_15 = arith.constant 0 : index
    %21 = vector.load %arg7[%c0_14, %c0_15] : memref<8x128xf32, #tpu.memory_space<vmem>>, vector<8x128xf32>
    tpu.vector_store %arg7[%c0_14, %c0_15], %20 {strides = array<i32>} : memref<8x128xf32, #tpu.memory_space<vmem>>, vector<8x128xf32>,
    return
  }
  func.func @transform_0(%arg0: i32) -> (i32, i32) {
    %c0_i32 = arith.constant 0 : i32
    %c0_i32_0 = arith.constant 0 : i32
    return %arg0, %c0_i32 : i32, i32
  }
  func.func @transform_1(%arg0: i32) -> (i32, i32) {
    %c0_i32 = arith.constant 0 : i32
    %c0_i32_0 = arith.constant 0 : i32
    return %arg0, %c0_i32 : i32, i32
  }
  func.func @transform_2(%arg0: i32) -> (i32, i32) {
    %c0_i32 = arith.constant 0 : i32
    %c0_i32_0 = arith.constant 0 : i32
    %c0_i32_1 = arith.constant 0 : i32
    return %c0_i32, %c0_i32_0 : i32, i32
  }
  func.func @transform_3(%arg0: i32) -> (i32, i32) {
    %c0_i32 = arith.constant 0 : i32
    %c0_i32_0 = arith.constant 0 : i32
    %c0_i32_1 = arith.constant 0 : i32
    return %c0_i32, %c0_i32_0 : i32, i32
  }
  func.func @transform_4(%arg0: i32) -> (i32, i32) {
    %c0_i32 = arith.constant 0 : i32
    %c0_i32_0 = arith.constant 0 : i32
    %c0_i32_1 = arith.constant 0 : i32
    return %c0_i32, %c0_i32_0 : i32, i32
  }
  func.func @transform_5(%arg0: i32) -> (i32, i32) {
    %c0_i32 = arith.constant 0 : i32
    %c0_i32_0 = arith.constant 0 : i32
    %c0_i32_1 = arith.constant 0 : i32
    return %c0_i32, %c0_i32_0 : i32, i32
  }
  func.func @transform_6(%arg0: i32) -> (i32, i32) {
    %c0_i32 = arith.constant 0 : i32
    %c0_i32_0 = arith.constant 0 : i32
    return %arg0, %c0_i32 : i32, i32
  }
}

</mosaic_0001>

<llo_original>
// kernel: mlb_forward.1
$region0: #{mlb_forward.1}
  #allocation0 [shape = 'u32[]', space=smem, size = 0x4, offset = 0x4, fixed_abs, tag = 'smem constant byte address 0x4 - core index']
  #allocation1 [shape = 'u32[144,128]{1,0:T(1,128)}', space=vmem, size = 0x12000, scoped, tag = 'internal scratch']
  %s0 = inlined_call_operand.hbm [shape: f32[8,128], index: 0, kind: input, shape index: {}]
  %s1 = inlined_call_operand.hbm [shape: f32[8,128], index: 1, kind: input, shape index: {}]
  %s2 = inlined_call_operand.hbm [shape: f32[128,128], index: 2, kind: input, shape index: {}]
  %s3 = inlined_call_operand.vmem [shape: f32[1,128], index: 3, kind: input, shape index: {}]
  %s4 = inlined_call_operand.hbm [shape: f32[128,128], index: 4, kind: input, shape index: {}]
  %s5 = inlined_call_operand.vmem [shape: f32[1,128], index: 5, kind: input, shape index: {}]
  %s6 = inlined_call_operand.hbm [shape: f32[8,128], index: 6, kind: output, shape index: {}]
  %s7 = sld [smem:[#allocation0]]
  $region50: #{mlb_forward.1} parent=0
    _
  %s9 = ssub.s32 1, %s7
  %s10 = scalar_select 0, %s9, %s7
  $region1: #{mlb_forward.1} parent=0
    #allocation2 [shape = 'u8[4096]{0}', space=vmem, size = 0x1000, scoped, tag = 'input window, operand 0, single buffered']
    #allocation3 [shape = 's32[1]{0}', space=sflag, size = 0x4, scoped, tag = 'scoped memory for mlb_forward.1']
    #allocation4 [shape = 's32[1]{0}', space=sflag, size = 0x4, scoped, tag = 'scoped memory for mlb_forward.1']
    #allocation5 [shape = 'u8[4096]{0}', space=vmem, size = 0x1000, scoped, tag = 'input window, operand 1, single buffered']
    #allocation6 [shape = 's32[1]{0}', space=sflag, size = 0x4, scoped, tag = 'scoped memory for mlb_forward.1']
    #allocation7 [shape = 'u8[65536]{0}', space=vmem, size = 0x10000, scoped, tag = 'input window, operand 2, single buffered']
    #allocation8 [shape = 'u8[65536]{0}', space=vmem, size = 0x10000, scoped, tag = 'input window, operand 4, single buffered']
    #allocation9 [shape = 's32[1]{0}', space=sflag, size = 0x4, scoped, tag = 'scoped memory for mlb_forward.1']
    #allocation10 [shape = 'u8[4096]{0}', space=vmem, size = 0x1000, scoped, tag = 'output window, operand 0, single buffered']
    %11 = vsyncpa [#allocation3], 0
    %12 = vsyncpa [#allocation6], 0
    %13 = vsyncpa [#allocation9], 0
    %14 = vsyncpa [#allocation4], 0
    // Predicated region
    $region2: #{mlb_forward.1} parent=1 // pred_check
      _
    $region3: #{mlb_forward.1} parent=1 // pred_check_branch
      %16 = sbr.rel (0) target = $region5
    $region4: #{mlb_forward.1} parent=1 // pred_region
      %s18 = ssub.s32 128, 128
      %19 = vsyncadd [#allocation3], %s18
      %s21 = sshll.u32 [#allocation2], 4
      %s22 = int_to_ptr.vmem [resolvable:$true] %s21
      %24 = dma.hbm_to_vmem [thread:$0]  %s0, 128, %s22, [#allocation3]
    $region5: #{mlb_forward.1} parent=1 // pred_fallthru
      _
    // Predicated region
    $region6: #{mlb_forward.1} parent=1 // pred_check
      _
    $region7: #{mlb_forward.1} parent=1 // pred_check_branch
      %26 = sbr.rel (0) target = $region9
    $region8: #{mlb_forward.1} parent=1 // pred_region
      %s28 = ssub.s32 128, 128
      %29 = vsyncadd [#allocation6], %s28
      %s31 = sshll.u32 [#allocation5], 4
      %s32 = int_to_ptr.vmem [resolvable:$true] %s31
      %34 = dma.hbm_to_vmem [thread:$0]  %s1, 128, %s32, [#allocation6]
    $region9: #{mlb_forward.1} parent=1 // pred_fallthru
      _
    // Predicated region
    $region10: #{mlb_forward.1} parent=1 // pred_check
      _
    $region11: #{mlb_forward.1} parent=1 // pred_check_branch
      %36 = sbr.rel (0) target = $region13
    $region12: #{mlb_forward.1} parent=1 // pred_region
      %s38 = ssub.s32 2048, 2048
      %39 = vsyncadd [#allocation6], %s38
      %s40 = sshll.u32 [#allocation7], 4
      %s41 = int_to_ptr.vmem [resolvable:$true] %s40
      %46 = dma.hbm_to_vmem [thread:$0]  %s2, 2048, %s41, [#allocation6], 128, 128, 8
    $region13: #{mlb_forward.1} parent=1 // pred_fallthru
      _
    // Predicated region
    $region14: #{mlb_forward.1} parent=1 // pred_check
      _
    $region15: #{mlb_forward.1} parent=1 // pred_check_branch
      %48 = sbr.rel (0) target = $region17
    $region16: #{mlb_forward.1} parent=1 // pred_region
      _
    $region17: #{mlb_forward.1} parent=1 // pred_fallthru
      _
    // Predicated region
    $region18: #{mlb_forward.1} parent=1 // pred_check
      _
    $region19: #{mlb_forward.1} parent=1 // pred_check_branch
      %50 = sbr.rel (0) target = $region21
    $region20: #{mlb_forward.1} parent=1 // pred_region
      %s52 = ssub.s32 2048, 2048
      %53 = vsyncadd [#allocation9], %s52
      %s54 = sshll.u32 [#allocation8], 4
      %s55 = int_to_ptr.vmem [resolvable:$true] %s54
      %60 = dma.hbm_to_vmem [thread:$0]  %s4, 2048, %s55, [#allocation9], 128, 128, 8
    $region21: #{mlb_forward.1} parent=1 // pred_fallthru
      _
    // Predicated region
    $region22: #{mlb_forward.1} parent=1 // pred_check
      _
    $region23: #{mlb_forward.1} parent=1 // pred_check_branch
      %62 = sbr.rel (0) target = $region25
    $region24: #{mlb_forward.1} parent=1 // pred_region
      _
    $region25: #{mlb_forward.1} parent=1 // pred_fallthru
      _
    // Predicated region
    $region26: #{mlb_forward.1} parent=1 // pred_check
      _
    $region27: #{mlb_forward.1} parent=1 // pred_check_branch
      %64 = sbr.rel (0) target = $region29
    $region28: #{mlb_forward.1} parent=1 // pred_region
      %65 = dma.done [#allocation3], 128
    $region29: #{mlb_forward.1} parent=1 // pred_fallthru
      _
    // Predicated region
    $region30: #{mlb_forward.1} parent=1 // pred_check
      _
    $region31: #{mlb_forward.1} parent=1 // pred_check_branch
      %67 = sbr.rel (0) target = $region33
    $region32: #{mlb_forward.1} parent=1 // pred_region
      %68 = dma.done [#allocation6], 128
    $region33: #{mlb_forward.1} parent=1 // pred_fallthru
      _
    // Predicated region
    $region34: #{mlb_forward.1} parent=1 // pred_check
      _
    $region35: #{mlb_forward.1} parent=1 // pred_check_branch
      %70 = sbr.rel (0) target = $region37
    $region36: #{mlb_forward.1} parent=1 // pred_region
      %71 = dma.done [#allocation6], 2048
    $region37: #{mlb_forward.1} parent=1 // pred_fallthru
      _
    // Predicated region
    $region38: #{mlb_forward.1} parent=1 // pred_check
      _
    $region39: #{mlb_forward.1} parent=1 // pred_check_branch
      %73 = sbr.rel (0) target = $region41
    $region40: #{mlb_forward.1} parent=1 // pred_region
      %74 = dma.done [#allocation9], 2048
    $region41: #{mlb_forward.1} parent=1 // pred_fallthru
      _
    %v75 = vld [vmem:[#allocation2] sm:$0xff]
    %v76 = vld [vmem:[#allocation5] sm:$0xff]
    %v77 = vld [vmem:[#allocation7] sm:$0xff]
    %v78 = vld [vmem:[#allocation7 + $0x8] sm:$0xff]
    %v79 = vld [vmem:[#allocation7 + $0x10] sm:$0xff]
    %v80 = vld [vmem:[#allocation7 + $0x18] sm:$0xff]
    %v81 = vld [vmem:[#allocation7 + $0x20] sm:$0xff]
    %v82 = vld [vmem:[#allocation7 + $0x28] sm:$0xff]
    %v83 = vld [vmem:[#allocation7 + $0x30] sm:$0xff]
    %v84 = vld [vmem:[#allocation7 + $0x38] sm:$0xff]
    %v85 = vld [vmem:[#allocation7 + $0x40] sm:$0xff]
    %v86 = vld [vmem:[#allocation7 + $0x48] sm:$0xff]
    %v87 = vld [vmem:[#allocation7 + $0x50] sm:$0xff]
    %v88 = vld [vmem:[#allocation7 + $0x58] sm:$0xff]
    %v89 = vld [vmem:[#allocation7 + $0x60] sm:$0xff]
    %v90 = vld [vmem:[#allocation7 + $0x68] sm:$0xff]
    %v91 = vld [vmem:[#allocation7 + $0x70] sm:$0xff]
    %v92 = vld [vmem:[#allocation7 + $0x78] sm:$0xff]
    %v93 = vld [vmem:[%s3] sm:$0x1]
    %v95 = vlaneseq
    %v96 = vshrl.u32 %v95, 7
    %v97 = vsub.s32 0, %v96
    %v98 = vrot.slane %v93, %v97
    %100 = vmatprep.subr.mxu0 0.0
    %101 = vmatpush1.msra.mxu0 %v77
    %102 = vmatprep.subr.mxu0 0.0
    %103 = vmatpush1.msra.mxu0 %v78
    %104 = vmatprep.subr.mxu0 0.0
    %105 = vmatpush1.msra.mxu0 %v79
    %106 = vmatprep.subr.mxu0 0.0
    %107 = vmatpush1.msra.mxu0 %v80
    %108 = vmatprep.subr.mxu0 0.0
    %109 = vmatpush1.msra.mxu0 %v81
    %110 = vmatprep.subr.mxu0 0.0
    %111 = vmatpush1.msra.mxu0 %v82
    %112 = vmatprep.subr.mxu0 0.0
    %113 = vmatpush1.msra.mxu0 %v83
    %114 = vmatprep.subr.mxu0 0.0
    %115 = vmatpush1.msra.mxu0 %v84
    %116 = vmatprep.subr.mxu0 0.0
    %117 = vmatpush1.msra.mxu0 %v85
    %118 = vmatprep.subr.mxu0 0.0
    %119 = vmatpush1.msra.mxu0 %v86
    %120 = vmatprep.subr.mxu0 0.0
    %121 = vmatpush1.msra.mxu0 %v87
    %122 = vmatprep.subr.mxu0 0.0
    %123 = vmatpush1.msra.mxu0 %v88
    %124 = vmatprep.subr.mxu0 0.0
    %125 = vmatpush1.msra.mxu0 %v89
    %126 = vmatprep.subr.mxu0 0.0
    %127 = vmatpush1.msra.mxu0 %v90
    %128 = vmatprep.subr.mxu0 0.0
    %129 = vmatpush1.msra.mxu0 %v91
    %130 = vmatprep.subr.mxu0 0.0
    %131 = vmatpush1.msra.mxu0 %v92
    %132 = vmatprep.subr.mxu0 0.0
    %133 = vmatpush1.msra.mxu0 0.0
    %134 = vmatprep.subr.mxu0 0.0
    %135 = vmatpush1.msra.mxu0 0.0
    %136 = vmatprep.subr.mxu0 0.0
    %137 = vmatpush1.msra.mxu0 0.0
    %138 = vmatprep.subr.mxu0 0.0
    %139 = vmatpush1.msra.mxu0 0.0
    %140 = vmatprep.subr.mxu0 0.0
    %141 = vmatpush1.msra.mxu0 0.0
    %142 = vmatprep.subr.mxu0 0.0
    %143 = vmatpush1.msra.mxu0 0.0
    %144 = vmatprep.subr.mxu0 0.0
    %145 = vmatpush1.msra.mxu0 0.0
    %146 = vmatprep.subr.mxu0 0.0
    %147 = vmatpush1.msra.mxu0 0.0
    %148 = vmatprep.subr.mxu0 0.0
    %149 = vmatpush1.msra.mxu0 0.0
    %150 = vmatprep.subr.mxu0 0.0
    %151 = vmatpush1.msra.mxu0 0.0
    %152 = vmatprep.subr.mxu0 0.0
    %153 = vmatpush1.msra.mxu0 0.0
    %154 = vmatprep.subr.mxu0 0.0
    %155 = vmatpush1.msra.mxu0 0.0
    %156 = vmatprep.subr.mxu0 0.0
    %157 = vmatpush1.msra.mxu0 0.0
    %158 = vmatprep.subr.mxu0 0.0
    %159 = vmatpush1.msra.mxu0 0.0
    %160 = vmatprep.subr.mxu0 0.0
    %161 = vmatpush1.msra.mxu0 0.0
    %162 = vmatprep.subr.mxu0 0.0
    %163 = vmatpush1.msra.mxu0 0.0
    %164 = vmatprep.mubr.f32.mxu0 0.0
    %165 = vmatmul.mubr.f32.gmra.mrb[0].mxu0 %v75
    %v166 = vpop.f32.mrb[0].mxu0
    %v167 = vadd.f32 %v98, %v166
    %v168 = vpop.f32.mrb[0].mxu0
    %169 = vdwg.mxu0
    %v170 = vld [vmem:[#allocation8] sm:$0xff]
    %v171 = vld [vmem:[#allocation8 + $0x8] sm:$0xff]
    %v172 = vld [vmem:[#allocation8 + $0x10] sm:$0xff]
    %v173 = vld [vmem:[#allocation8 + $0x18] sm:$0xff]
    %v174 = vld [vmem:[#allocation8 + $0x20] sm:$0xff]
    %v175 = vld [vmem:[#allocation8 + $0x28] sm:$0xff]
    %v176 = vld [vmem:[#allocation8 + $0x30] sm:$0xff]
    %v177 = vld [vmem:[#allocation8 + $0x38] sm:$0xff]
    %v178 = vld [vmem:[#allocation8 + $0x40] sm:$0xff]
    %v179 = vld [vmem:[#allocation8 + $0x48] sm:$0xff]
    %v180 = vld [vmem:[#allocation8 + $0x50] sm:$0xff]
    %v181 = vld [vmem:[#allocation8 + $0x58] sm:$0xff]
    %v182 = vld [vmem:[#allocation8 + $0x60] sm:$0xff]
    %v183 = vld [vmem:[#allocation8 + $0x68] sm:$0xff]
    %v184 = vld [vmem:[#allocation8 + $0x70] sm:$0xff]
    %v185 = vld [vmem:[#allocation8 + $0x78] sm:$0xff]
    %v186 = vld [vmem:[%s5] sm:$0x1]
    %v188 = vlaneseq
    %v189 = vshrl.u32 %v188, 7
    %v190 = vsub.s32 0, %v189
    %v191 = vrot.slane %v186, %v190
    %193 = vmatprep.subr.mxu0 0.0
    %194 = vmatpush1.msra.mxu0 %v170
    %195 = vmatprep.subr.mxu0 0.0
    %196 = vmatpush1.msra.mxu0 %v171
    %197 = vmatprep.subr.mxu0 0.0
    %198 = vmatpush1.msra.mxu0 %v172
    %199 = vmatprep.subr.mxu0 0.0
    %200 = vmatpush1.msra.mxu0 %v173
    %201 = vmatprep.subr.mxu0 0.0
    %202 = vmatpush1.msra.mxu0 %v174
    %203 = vmatprep.subr.mxu0 0.0
    %204 = vmatpush1.msra.mxu0 %v175
    %205 = vmatprep.subr.mxu0 0.0
    %206 = vmatpush1.msra.mxu0 %v176
    %207 = vmatprep.subr.mxu0 0.0
    %208 = vmatpush1.msra.mxu0 %v177
    %209 = vmatprep.subr.mxu0 0.0
    %210 = vmatpush1.msra.mxu0 %v178
    %211 = vmatprep.subr.mxu0 0.0
    %212 = vmatpush1.msra.mxu0 %v179
    %213 = vmatprep.subr.mxu0 0.0
    %214 = vmatpush1.msra.mxu0 %v180
    %215 = vmatprep.subr.mxu0 0.0
    %216 = vmatpush1.msra.mxu0 %v181
    %217 = vmatprep.subr.mxu0 0.0
    %218 = vmatpush1.msra.mxu0 %v182
    %219 = vmatprep.subr.mxu0 0.0
    %220 = vmatpush1.msra.mxu0 %v183
    %221 = vmatprep.subr.mxu0 0.0
    %222 = vmatpush1.msra.mxu0 %v184
    %223 = vmatprep.subr.mxu0 0.0
    %224 = vmatpush1.msra.mxu0 %v185
    %225 = vmatprep.subr.mxu0 0.0
    %226 = vmatpush1.msra.mxu0 0.0
    %227 = vmatprep.subr.mxu0 0.0
    %228 = vmatpush1.msra.mxu0 0.0
    %229 = vmatprep.subr.mxu0 0.0
    %230 = vmatpush1.msra.mxu0 0.0
    %231 = vmatprep.subr.mxu0 0.0
    %232 = vmatpush1.msra.mxu0 0.0
    %233 = vmatprep.subr.mxu0 0.0
    %234 = vmatpush1.msra.mxu0 0.0
    %235 = vmatprep.subr.mxu0 0.0
    %236 = vmatpush1.msra.mxu0 0.0
    %237 = vmatprep.subr.mxu0 0.0
    %238 = vmatpush1.msra.mxu0 0.0
    %239 = vmatprep.subr.mxu0 0.0
    %240 = vmatpush1.msra.mxu0 0.0
    %241 = vmatprep.subr.mxu0 0.0
    %242 = vmatpush1.msra.mxu0 0.0
    %243 = vmatprep.subr.mxu0 0.0
    %244 = vmatpush1.msra.mxu0 0.0
    %245 = vmatprep.subr.mxu0 0.0
    %246 = vmatpush1.msra.mxu0 0.0
    %247 = vmatprep.subr.mxu0 0.0
    %248 = vmatpush1.msra.mxu0 0.0
    %249 = vmatprep.subr.mxu0 0.0
    %250 = vmatpush1.msra.mxu0 0.0
    %251 = vmatprep.subr.mxu0 0.0
    %252 = vmatpush1.msra.mxu0 0.0
    %253 = vmatprep.subr.mxu0 0.0
    %254 = vmatpush1.msra.mxu0 0.0
    %255 = vmatprep.subr.mxu0 0.0
    %256 = vmatpush1.msra.mxu0 0.0
    %257 = vmatprep.mubr.f32.mxu0 0.0
    %258 = vmatmul.mubr.f32.gmra.mrb[0].mxu0 %v76
    %v259 = vpop.f32.mrb[0].mxu0
    %v260 = vadd.f32 %v191, %v259
    %v261 = vpop.f32.mrb[0].mxu0
    %262 = vdwg.mxu0
    %v263 = vmul.f32 %v167, %v260
    %v264 = vmul.f32 %v263, %v263
    %265 = vadd.xlane.f32.xlu0 %v264
    %v266 = vpop.xlane.xlu0 %265
    %v267 = vmax.f32 %v266, 1e-24
    %v268 = vrsqrt.pop %v267
    %v269 = vmul.f32 %v263, %v268
    %270 = vst [vmem:[#allocation10] sm:$0xff] %v269
    // Predicated region
    $region42: #{mlb_forward.1} parent=1 // pred_check
      _
    $region43: #{mlb_forward.1} parent=1 // pred_check_branch
      %272 = sbr.rel (0) target = $region45
    $region44: #{mlb_forward.1} parent=1 // pred_region
      %s274 = ssub.s32 128, 128
      %275 = vsyncadd [#allocation4], %s274
      %s277 = sshll.u32 [#allocation10], 4
      %s278 = int_to_ptr.vmem [resolvable:$true] %s277
      %280 = dma.vmem_to_hbm [thread:$0]  %s278, 128, %s6, [#allocation4]
    $region45: #{mlb_forward.1} parent=1 // pred_fallthru
      _
    // Predicated region
    $region46: #{mlb_forward.1} parent=1 // pred_check
      _
    $region47: #{mlb_forward.1} parent=1 // pred_check_branch
      %282 = sbr.rel (0) target = $region49
    $region48: #{mlb_forward.1} parent=1 // pred_region
      %283 = dma.done [#allocation4], 128
    $region49: #{mlb_forward.1} parent=1 // pred_fallthru
      _
    %284 = vsyncpa [#allocation3], 1
    %285 = vsyncpa [#allocation6], 1
    %286 = vsyncpa [#allocation9], 1
    %287 = vsyncpa [#allocation4], 1

</llo_original>
